<compile_context>
chip_gen: v7x
topology: tpu7x:2x2x1
jax: 0.10.0
libtpu: 0.0.40
codegen_flags: <defaults>
</compile_context>

<pallas_src>
import jax
import jax.numpy as jnp
from jax.experimental import pallas as pl
from jax.experimental.pallas import tpu as pltpu


# ----------------------------- Pallas kernel (hot path) ----------------------------- #

def pointwise_kernel(w_ref, b_ref, x_ref, o_ref):
    # w_ref: (C_PAD, K)  b_ref: (C_PAD, 1)  x_ref: (K, TN)  o_ref: (C_PAD, TN)
    acc = jnp.dot(w_ref[...], x_ref[...], preferred_element_type=jnp.float32)
    acc = acc + b_ref[...]                                   # bias broadcast over lanes
    o_ref[...] = jnp.maximum(acc, 0.0).astype(o_ref.dtype)   # 1x1 conv + bias + ReLU


def _pick_pixel_tile(p, k, c_pad, budget_bytes=6 * 1024 * 1024):
    """Largest multiple-of-128 divisor of p whose double-buffered blocks fit the budget."""
    if p % 128 != 0:
        return p  # block must equal the full array dim in this case
    best = None
    tn = 128
    while tn <= p:
        if p % tn == 0 and 2 * (k + c_pad) * tn * 4 <= budget_bytes:
            best = tn
        tn += 128
    return best if best is not None else 128


def batched_pointwise_conv(w_pad, b_pad, x_slabs):
    """out[g] = relu(w_pad @ x_slabs[g] + b_pad) for every slab g, in one pallas_call."""
    g, k, p = x_slabs.shape
    c_pad = w_pad.shape[0]
    tn = _pick_pixel_tile(p, k, c_pad)
    assert p % tn == 0

    return pl.pallas_call(
        pointwise_kernel,
        out_shape=jax.ShapeDtypeStruct((g, c_pad, p), jnp.float32),
        grid_spec=pltpu.PrefetchScalarGridSpec(
            num_scalar_prefetch=0,
            grid=(g, p // tn),
            in_specs=[
                pl.BlockSpec((c_pad, k), lambda gi, j: (0, 0)),     # weight, resident
                pl.BlockSpec((c_pad, 1), lambda gi, j: (0, 0)),     # bias, resident
                pl.BlockSpec((None, k, tn), lambda gi, j: (gi, 0, j)),
            ],
            out_specs=pl.BlockSpec((None, c_pad, tn), lambda gi, j: (gi, 0, j)),
        ),
        compiler_params=pltpu.CompilerParams(
            dimension_semantics=("parallel", "parallel")),
    )(w_pad, b_pad, x_slabs)


# ----------------------------- full forward ----------------------------- #

def _pad_rows_to_multiple(a, mult):
    pad = (-a.shape[0]) % mult
    if pad:
        a = jnp.pad(a, ((0, pad),) + ((0, 0),) * (a.ndim - 1))
    return a


def input_split_forward(x, w, b, num_splits):
    """InputSplitModule.forward with a synthetic pointwise-conv inner model."""
    B, F, C, H, W = x.shape
    input_per_model = F // num_splits
    assert F == num_splits * input_per_model
    c_out = w.shape[0]
    k = input_per_model * C
    p = H * W

    # One slab per (batch, split) chunk: (B, F, C, H, W) -> (B*S, K, P). Contiguous
    # reshape, no data movement, so the kernel reads x straight from HBM.
    x_slabs = x.reshape(B, num_splits, k, p).reshape(B * num_splits, k, p)

    # Pad output channels to a sublane multiple (8) for unmasked f32 stores.
    w_pad = _pad_rows_to_multiple(w, 8)
    b_pad = _pad_rows_to_multiple(b, 8)

    out_slabs = batched_pointwise_conv(w_pad, b_pad, x_slabs)   # (B*S, C_PAD, P)

    out = out_slabs[:, :c_out, :].reshape(B, num_splits, c_out, H, W)
    # torch.stack(outputs, dim=1) -> (B, S, C_OUT, H, W); 5-D, so no dim-merge branch.
    return out


# ----------------------------- pure-JAX reference ----------------------------- #

def _reference_forward(x, w, b, num_splits):
    B, F, C, H, W = x.shape
    fp = F // num_splits
    outs = []
    for i in range(0, F, fp):
        chunk = x[:, i:i + fp].reshape(B, fp * C, H * W)
        o = jnp.einsum("ok,bkp->bop", w, chunk) + b[None]
        outs.append(jnp.maximum(o, 0.0).reshape(B, w.shape[0], H, W))
    return jnp.stack(outs, axis=1)


if __name__ == "__main__":
    key = jax.random.PRNGKey(0)
    kx, kw, kb = jax.random.split(key, 3)

    # small shapes: B=2, F=8 frames split into num_splits=2 chunks of 4, C=3, 16x16
    B, F, C, H, W = 2, 8, 3, 16, 16
    NUM_SPLITS = 2
    C_OUT = 4
    K = (F // NUM_SPLITS) * C

    x = jax.random.normal(kx, (B, F, C, H, W), dtype=jnp.float32)
    w = jax.random.normal(kw, (C_OUT, K), dtype=jnp.float32) * 0.1
    b = jax.random.normal(kb, (C_OUT, 1), dtype=jnp.float32) * 0.1

    fwd = jax.jit(lambda x, w, b: input_split_forward(x, w, b, NUM_SPLITS))
    out = jax.block_until_ready(fwd(x, w, b))

    assert out.shape == (B, NUM_SPLITS, C_OUT, H, W), out.shape

    ref = jax.block_until_ready(_reference_forward(x, w, b, NUM_SPLITS))
    assert jnp.allclose(out, ref, rtol=2e-2, atol=2e-2), float(jnp.max(jnp.abs(out - ref)))

    print("KERNEL_OK")
</pallas_src>

<mosaic_0001>
module attributes {stable_mosaic.version = 11 : i64} {
  func.func @pointwise_kernel(%arg0: i32, %arg1: i32, %arg2: memref<8x12xf32, #tpu.memory_space<vmem>>, %arg3: memref<8x1xf32, #tpu.memory_space<vmem>>, %arg4: memref<1x12x256xf32, #tpu.memory_space<vmem>>, %arg5: memref<1x8x256xf32, #tpu.memory_space<vmem>>) attributes {dimension_semantics = [#tpu.dimension_semantics<parallel>, #tpu.dimension_semantics<parallel>], iteration_bounds = array<i64: 4, 1>, scalar_prefetch = 0 : i64, scratch_operands = 0 : i64, tpu.core_type = #tpu.core_type<tc>, window_params = [{pipeline_mode = #tpu.pipeline_mode<synchronous>, transform_indices = @transform_0, window_bounds = array<i64: 8, 12>}, {pipeline_mode = #tpu.pipeline_mode<synchronous>, transform_indices = @transform_1, window_bounds = array<i64: 8, 1>}, {transform_indices = @transform_2, window_bounds = array<i64: 1, 12, 256>}, {transform_indices = @transform_3, window_bounds = array<i64: 1, 8, 256>}]} {
    %c0 = arith.constant 0 : index
    %c0_0 = arith.constant 0 : index
    %0 = vector.load %arg2[%c0, %c0_0] : memref<8x12xf32, #tpu.memory_space<vmem>>, vector<8x12xf32>
    %c0_1 = arith.constant 0 : index
    %c0_2 = arith.constant 0 : index
    %c0_3 = arith.constant 0 : index
    %1 = vector.load %arg4[%c0_1, %c0_2, %c0_3] : memref<1x12x256xf32, #tpu.memory_space<vmem>>, vector<1x12x256xf32>
    %2 = vector.shape_cast %1 : vector<1x12x256xf32> to vector<12x256xf32>
    %cst = arith.constant dense<0.000000e+00> : vector<8x256xf32>
    %3 = tpu.matmul %0, %2, %cst {dimension_numbers = #tpu.dot_dimension_numbers<[1], [0], [0], [1], [0, 0, 1, 1], [], []>} : vector<8x12xf32>, vector<12x256xf32>, vector<8x256xf32> -> vector<8x256xf32>
    %c0_4 = arith.constant 0 : index
    %c0_5 = arith.constant 0 : index
    %4 = vector.load %arg3[%c0_4, %c0_5] : memref<8x1xf32, #tpu.memory_space<vmem>>, vector<8x1xf32>
    %5 = vector.broadcast %4 : vector<8x1xf32> to vector<8x256xf32>
    %6 = arith.addf %3, %5 : vector<8x256xf32>
    %cst_6 = arith.constant 0.000000e+00 : f32
    %7 = vector.broadcast %cst_6 : f32 to vector<8x256xf32>
    %8 = arith.maximumf %6, %7 : vector<8x256xf32>
    %c0_7 = arith.constant 0 : index
    %c0_8 = arith.constant 0 : index
    %c0_9 = arith.constant 0 : index
    %9 = vector.load %arg5[%c0_7, %c0_8, %c0_9] : memref<1x8x256xf32, #tpu.memory_space<vmem>>, vector<1x8x256xf32>
    %10 = vector.shape_cast %9 : vector<1x8x256xf32> to vector<8x256xf32>
    %11 = vector.shape_cast %8 : vector<8x256xf32> to vector<1x8x256xf32>
    tpu.vector_store %arg5[%c0_7, %c0_8, %c0_9], %11 {strides = array<i32>} : memref<1x8x256xf32, #tpu.memory_space<vmem>>, vector<1x8x256xf32>,
    return
  }
  func.func @transform_0(%arg0: i32, %arg1: i32) -> (i32, i32) {
    %c0_i32 = arith.constant 0 : i32
    %c0_i32_0 = arith.constant 0 : i32
    %c0_i32_1 = arith.constant 0 : i32
    return %c0_i32, %c0_i32_0 : i32, i32
  }
  func.func @transform_1(%arg0: i32, %arg1: i32) -> (i32, i32) {
    %c0_i32 = arith.constant 0 : i32
    %c0_i32_0 = arith.constant 0 : i32
    %c0_i32_1 = arith.constant 0 : i32
    return %c0_i32, %c0_i32_0 : i32, i32
  }
  func.func @transform_2(%arg0: i32, %arg1: i32) -> (i32, i32, i32) {
    %c0_i32 = arith.constant 0 : i32
    %c0_i32_0 = arith.constant 0 : i32
    return %arg0, %c0_i32, %arg1 : i32, i32, i32
  }
  func.func @transform_3(%arg0: i32, %arg1: i32) -> (i32, i32, i32) {
    %c0_i32 = arith.constant 0 : i32
    %c0_i32_0 = arith.constant 0 : i32
    return %arg0, %c0_i32, %arg1 : i32, i32, i32
  }
}

</mosaic_0001>

<llo_original>
// kernel: _lambda_.1
$region0: #{_lambda_.1}
  #allocation0 [shape = 'u32[]', space=smem, size = 0x4, offset = 0x4, fixed_abs, tag = 'smem constant byte address 0x4 - core index']
  #allocation1 [shape = 'u32[144,128]{1,0:T(1,128)}', space=vmem, size = 0x12000, scoped, tag = 'internal scratch']
  %s0 = inlined_call_operand.vmem [shape: f32[8,12], index: 0, kind: input, shape index: {}]
  %s1 = inlined_call_operand.vmem [shape: f32[8,1], index: 1, kind: input, shape index: {}]
  %s2 = inlined_call_operand.vmem [shape: f32[4,12,256], index: 2, kind: input, shape index: {}]
  %s3 = inlined_call_operand.vmem [shape: f32[4,8,256], index: 3, kind: output, shape index: {}]
  %s4 = sld [smem:[#allocation0]]
  $region45: #{_lambda_.1} parent=0
    _
  %s6 = ssub.s32 1, %s4
  %s7 = scalar_select 0, %s6, %s4
  loop: start=0, step=1, limit=6
  $region2: #{_lambda_.1} parent=0 // loop_pre_header
    _
  $region3: #{_lambda_.1} parent=0 // loop_header
    %s9 = sphi 0, %s13
    %p10 = scmp.ge.s32.totalorder %s9, 6
    %s16 = sphi 0, %s28
    %s17 = sphi 0, %s24
    %s18 = sphi 0, %s16
    %s19 = sphi 0, %s17
    %s20 = sphi 0, %s18
    %s21 = sphi 0, %s19
    %s29 = sphi 0, %s29
    %s31 = sphi 0, %s29
    %s32 = sphi 0, %s31
    %s46 = sphi 0, %s32
    %s50 = sphi 0, %s50
    %s52 = sphi 0, %s50
    %s53 = sphi 0, %s52
    %s67 = sphi 0, %s53
    %s75 = sphi 0, %s77
    %s78 = sphi 0, %s75
    %s79 = sphi 0, %s78
    %s95 = sphi 0, %s79
    %s103 = sphi 0, %s105
    %s106 = sphi 0, %s103
    %s107 = sphi 0, %s106
    %s123 = sphi 0, %s107
  $region4: #{_lambda_.1} parent=0 // loop_header_branch
    %12 = sbr.rel (%p10) target = $region8
  $region5: #{_lambda_.1} parent=0 // loop_body
    %s14 = ssub.s32 %s9, 1
    %s15 = ssub.s32 %s9, 2
    %s22 = sadd.s32 1, %s17
    %p23 = scmp.ge.s32.totalorder %s22, 1
    %s24 = scalar_select %p23, 0, %s22
    %s25 = sadd.s32 1, %s16
    %s26 = scalar_select %p23, %s25, %s16
    %p27 = scmp.ge.s32.totalorder %s26, 4
    %s28 = scalar_select %p27, 0, %s26
    %s30 = sadd.s32 %s29, 1
    %p33 = scmp.eq.s32.totalorder %s9, 3
    %p34 = scmp.ne.s32.totalorder %s29, %s31
    %p35 = scmp.eq.s32.totalorder %s9, 0
    %p36 = por %p34, %p35
    %p37 = scmp.ne.s32.totalorder %s29, %s31
    %p38 = scmp.eq.s32.totalorder %s14, 3
    %p39 = por %p37, %p38
    %p40 = scmp.ne.s32.totalorder %s31, %s32
    %p41 = scmp.eq.s32.totalorder %s14, 0
    %p42 = por %p40, %p41
    %p43 = scmp.ne.s32.totalorder %s31, %s32
    %p44 = scmp.eq.s32.totalorder %s15, 3
    %p45 = por %p43, %p44
    %p47 = scmp.ne.s32.totalorder %s32, %s46
    %p48 = scmp.eq.s32.totalorder %s15, 0
    %p49 = por %p47, %p48
    %s51 = sadd.s32 %s50, 1
    %p54 = scmp.eq.s32.totalorder %s9, 3
    %p55 = scmp.ne.s32.totalorder %s50, %s52
    %p56 = scmp.eq.s32.totalorder %s9, 0
    %p57 = por %p55, %p56
    %p58 = scmp.ne.s32.totalorder %s50, %s52
    %p59 = scmp.eq.s32.totalorder %s14, 3
    %p60 = por %p58, %p59
    %p61 = scmp.ne.s32.totalorder %s52, %s53
    %p62 = scmp.eq.s32.totalorder %s14, 0
    %p63 = por %p61, %p62
    %p64 = scmp.ne.s32.totalorder %s52, %s53
    %p65 = scmp.eq.s32.totalorder %s15, 3
    %p66 = por %p64, %p65
    %p68 = scmp.ne.s32.totalorder %s53, %s67
    %p69 = scmp.eq.s32.totalorder %s15, 0
    %p70 = por %p68, %p69
    %s71 = ssub.s32 %s16, %s28
    %s72 = ssub.s32 %s17, %s24
    %s73 = sor.u32 %s71, %s72
    %p74 = scmp.eq.s32.totalorder %s73, 0
    %s76 = sadd.s32 %s75, 1
    %s77 = scalar_select %p74, %s75, %s76
    %p80 = pneg %p74
    %p81 = scmp.eq.s32.totalorder %s9, 3
    %p82 = por %p80, %p81
    %p83 = scmp.ne.s32.totalorder %s75, %s78
    %p84 = scmp.eq.s32.totalorder %s9, 0
    %p85 = por %p83, %p84
    %p86 = scmp.ne.s32.totalorder %s75, %s78
    %p87 = scmp.eq.s32.totalorder %s14, 3
    %p88 = por %p86, %p87
    %p89 = scmp.ne.s32.totalorder %s78, %s79
    %p90 = scmp.eq.s32.totalorder %s14, 0
    %p91 = por %p89, %p90
    %p92 = scmp.ne.s32.totalorder %s78, %s79
    %p93 = scmp.eq.s32.totalorder %s15, 3
    %p94 = por %p92, %p93
    %p96 = scmp.ne.s32.totalorder %s79, %s95
    %p97 = scmp.eq.s32.totalorder %s15, 0
    %p98 = por %p96, %p97
    %s99 = ssub.s32 %s16, %s28
    %s100 = ssub.s32 %s17, %s24
    %s101 = sor.u32 %s99, %s100
    %p102 = scmp.eq.s32.totalorder %s101, 0
    %s104 = sadd.s32 %s103, 1
    %s105 = scalar_select %p102, %s103, %s104
    %p108 = pneg %p102
    %p109 = scmp.eq.s32.totalorder %s9, 3
    %p110 = por %p108, %p109
    %p111 = scmp.ne.s32.totalorder %s103, %s106
    %p112 = scmp.eq.s32.totalorder %s9, 0
    %p113 = por %p111, %p112
    %p114 = scmp.ne.s32.totalorder %s103, %s106
    %p115 = scmp.eq.s32.totalorder %s14, 3
    %p116 = por %p114, %p115
    %p117 = scmp.ne.s32.totalorder %s106, %s107
    %p118 = scmp.eq.s32.totalorder %s14, 0
    %p119 = por %p117, %p118
    %p120 = scmp.ne.s32.totalorder %s106, %s107
    %p121 = scmp.eq.s32.totalorder %s15, 3
    %p122 = por %p120, %p121
    %p124 = scmp.ne.s32.totalorder %s107, %s123
    %p125 = scmp.eq.s32.totalorder %s15, 0
    %p126 = por %p124, %p125
    %p127 = scmp.le.s32.totalorder 1, %s9
    %p128 = scmp.lt.s32.totalorder %s9, 5
    %p129 = pnand %p127, %p128
    %p130 = pneg %p129
    // Predicated region
    $region9: #{_lambda_.1} parent=5 // pred_check
      _
    $region10: #{_lambda_.1} parent=5 // pred_check_branch
      %132 = sbr.rel (%p129) target = $region12
    $region11: #{_lambda_.1} parent=5 // pred_region
      %s133 = ssub.s32 %s9, 1
      // Predicated region
      $region13: #{_lambda_.1} parent=11 // pred_check
        %p134 = pneg %p42
      $region14: #{_lambda_.1} parent=11 // pred_check_branch
        %136 = sbr.rel (%p134) target = $region16
      $region15: #{_lambda_.1} parent=11 // pred_region
        _
      $region16: #{_lambda_.1} parent=11 // pred_fallthru
        _
      // Predicated region
      $region17: #{_lambda_.1} parent=11 // pred_check
        %p137 = pneg %p63
      $region18: #{_lambda_.1} parent=11 // pred_check_branch
        %139 = sbr.rel (%p137) target = $region20
      $region19: #{_lambda_.1} parent=11 // pred_region
        _
      $region20: #{_lambda_.1} parent=11 // pred_fallthru
        _
    $region12: #{_lambda_.1} parent=5 // pred_fallthru
      _
    %p140 = scmp.lt.s32.totalorder %s9, 4
    // Predicated region
    $region21: #{_lambda_.1} parent=5 // pred_check
      %p141 = pneg %p140
    $region22: #{_lambda_.1} parent=5 // pred_check_branch
      %143 = sbr.rel (%p141) target = $region24
    $region23: #{_lambda_.1} parent=5 // pred_region
      // Predicated region
      $region25: #{_lambda_.1} parent=23 // pred_check
        %p144 = pneg %p85
      $region26: #{_lambda_.1} parent=23 // pred_check_branch
        %146 = sbr.rel (%p144) target = $region28
      $region27: #{_lambda_.1} parent=23 // pred_region
        %s147 = smul.u32 2, %s17
        %p148 = scmp.lt.s32.totalorder %s16, 3
        %s149 = scalar_select %p148, %s16, 3
        %p150 = scmp.lt.s32.totalorder %s147, 1
        %s151 = scalar_select %p150, %s147, 1
        %s152 = smul.addr %s149, 4
        %s153 = sadd.s32 %s151, %s152
        %s154 = smul.addr %s153, 8
        %s155 = scalar_lea.vmem %s2, %s154
        %s156 = smul.u32 2, %s17
      $region28: #{_lambda_.1} parent=23 // pred_fallthru
        _
    $region24: #{_lambda_.1} parent=5 // pred_fallthru
      _
    %p157 = scmp.le.s32.totalorder 1, %s9
    %p158 = scmp.lt.s32.totalorder %s9, 5
    %p159 = pnand %p157, %p158
    %p160 = pneg %p159
    // Predicated region
    $region29: #{_lambda_.1} parent=5 // pred_check
      _
    $region30: #{_lambda_.1} parent=5 // pred_check_branch
      %162 = sbr.rel (%p159) target = $region32
    $region31: #{_lambda_.1} parent=5 // pred_region
      %s163 = ssub.s32 %s9, 1
      %p164 = pneg %p42
      %p165 = pneg %p39
      %p166 = pneg %p63
      %p167 = pneg %p60
      %s168 = smul.u32 2, %s19
      %p169 = scmp.lt.s32.totalorder %s18, 3
      %s170 = scalar_select %p169, %s18, 3
      %p171 = scmp.lt.s32.totalorder %s168, 1
      %s172 = scalar_select %p171, %s168, 1
      %s173 = smul.addr %s170, 4
      %s174 = sadd.s32 %s172, %s173
      %s175 = smul.addr %s174, 8
      %s176 = scalar_lea.vmem %s2, %s175
      %p177 = pneg %p91
      %p178 = pneg %p88
      %p179 = pneg %p119
      %p180 = pneg %p116
      %s181 = smul.u32 2, %s19
      %p182 = scmp.lt.s32.totalorder %s18, 3
      %s183 = scalar_select %p182, %s18, 3
      %p184 = scmp.lt.s32.totalorder %s181, 1
      %s185 = scalar_select %p184, %s181, 1
      %s186 = smul.addr %s183, 2
      %s187 = sadd.s32 %s185, %s186
      %s188 = smul.addr %s187, 8
      %s189 = scalar_lea.vmem %s3, %s188
      %s190 = smul.u32 2, %s19
      %p191 = scmp.lt.s32.totalorder %s18, 3
      %s192 = scalar_select %p191, %s18, 3
      %p193 = scmp.lt.s32.totalorder %s190, 1
      %s194 = scalar_select %p193, %s190, 1
      %s195 = smul.addr %s192, 4
      %s196 = sadd.s32 %s194, %s195
      %s197 = smul.addr %s196, 8
      %s198 = scalar_lea.vmem %s2, %s197
      %s199 = smul.u32 2, %s19
      %s200 = smul.u32 2, %s19
      %p201 = scmp.lt.s32.totalorder %s18, 3
      %s202 = scalar_select %p201, %s18, 3
      %p203 = scmp.lt.s32.totalorder %s200, 1
      %s204 = scalar_select %p203, %s200, 1
      %s205 = smul.addr %s202, 2
      %s206 = sadd.s32 %s204, %s205
      %s207 = smul.addr %s206, 8
      %s208 = scalar_lea.vmem %s3, %s207
      %s209 = smul.u32 2, %s19
      %v210 = vld [vmem:[%s0] sm:$0xff]
      %v211 = vld [vmem:[%s198] sm:$0xff]
      %v212 = vld [vmem:[%s198 + $0x8] sm:$0xff]
      %v213 = vld [vmem:[%s198 + $0x10] sm:$0xf]
      %v214 = vld [vmem:[%s198 + $0x18] sm:$0xf]
      %v215 = vld [vmem:[%s1] sm:$0xff]
      %217 = vset.pattern.permute.xlu0 0
      %218 = vperm.xlu0 %217, %v215
      %v219 = vpop.permute.xlu0 %218
      %vm221 = vcmask 97280
      %v223 = vsel %vm221, %v210, 0
      %vm225 = vcmask 1043456
      %v227 = vsel %vm225, %v213, 0
      %v230 = vsel %vm225, %v214, 0
      %232 = vmatprep.subr.mxu0 %v212
      %233 = vmatpush1.msra.mxu0 %v211
      %234 = vmatprep.subr.mxu0 %v230
      %235 = vmatpush1.msra.mxu0 %v227
      %236 = vmatprep.subr.mxu0 0.0
      %237 = vmatpush1.msra.mxu0 0.0
      %238 = vmatprep.subr.mxu0 0.0
      %239 = vmatpush1.msra.mxu0 0.0
      %240 = vmatprep.subr.mxu0 0.0
      %241 = vmatpush1.msra.mxu0 0.0
      %242 = vmatprep.subr.mxu0 0.0
      %243 = vmatpush1.msra.mxu0 0.0
      %244 = vmatprep.subr.mxu0 0.0
      %245 = vmatpush1.msra.mxu0 0.0
      %246 = vmatprep.subr.mxu0 0.0
      %247 = vmatpush1.msra.mxu0 0.0
      %248 = vmatprep.subr.mxu0 0.0
      %249 = vmatpush1.msra.mxu0 0.0
      %250 = vmatprep.subr.mxu0 0.0
      %251 = vmatpush1.msra.mxu0 0.0
      %252 = vmatprep.subr.mxu0 0.0
      %253 = vmatpush1.msra.mxu0 0.0
      %254 = vmatprep.subr.mxu0 0.0
      %255 = vmatpush1.msra.mxu0 0.0
      %256 = vmatprep.subr.mxu0 0.0
      %257 = vmatpush1.msra.mxu0 0.0
      %258 = vmatprep.subr.mxu0 0.0
      %259 = vmatpush1.msra.mxu0 0.0
      %260 = vmatprep.subr.mxu0 0.0
      %261 = vmatpush1.msra.mxu0 0.0
      %262 = vmatprep.subr.mxu0 0.0
      %263 = vmatpush1.msra.mxu0 0.0
      %264 = vmatprep.subr.mxu0 0.0
      %265 = vmatpush1.msra.mxu0 0.0
      %266 = vmatprep.subr.mxu0 0.0
      %267 = vmatpush1.msra.mxu0 0.0
      %268 = vmatprep.subr.mxu0 0.0
      %269 = vmatpush1.msra.mxu0 0.0
      %270 = vmatprep.subr.mxu0 0.0
      %271 = vmatpush1.msra.mxu0 0.0
      %272 = vmatprep.subr.mxu0 0.0
      %273 = vmatpush1.msra.mxu0 0.0
      %274 = vmatprep.subr.mxu0 0.0
      %275 = vmatpush1.msra.mxu0 0.0
      %276 = vmatprep.subr.mxu0 0.0
      %277 = vmatpush1.msra.mxu0 0.0
      %278 = vmatprep.subr.mxu0 0.0
      %279 = vmatpush1.msra.mxu0 0.0
      %280 = vmatprep.subr.mxu0 0.0
      %281 = vmatpush1.msra.mxu0 0.0
      %282 = vmatprep.subr.mxu0 0.0
      %283 = vmatpush1.msra.mxu0 0.0
      %284 = vmatprep.subr.mxu0 0.0
      %285 = vmatpush1.msra.mxu0 0.0
      %286 = vmatprep.subr.mxu0 0.0
      %287 = vmatpush1.msra.mxu0 0.0
      %288 = vmatprep.subr.mxu0 0.0
      %289 = vmatpush1.msra.mxu0 0.0
      %290 = vmatprep.subr.mxu0 0.0
      %291 = vmatpush1.msra.mxu0 0.0
      %292 = vmatprep.subr.mxu0 0.0
      %293 = vmatpush1.msra.mxu0 0.0
      %294 = vmatprep.subr.mxu0 0.0
      %295 = vmatpush1.msra.mxu0 0.0
      %296 = vmatprep.mubr.f32.mxu0 0.0
      %297 = vmatmul.mubr.f32.gmra.mrb[0].mxu0 %v223
      %v298 = vpop.f32.mrb[0].mxu0
      %v299 = vadd.f32 %v219, %v298
      %v300 = vpop.f32.mrb[0].mxu0
      %v301 = vadd.f32 %v219, %v300
      %302 = vdwg.mxu0
      %v303 = vmax.f32 %v299, 0.0
      %v304 = vmax.f32 %v301, 0.0
      %305 = vst [vmem:[%s208] sm:$0xff] %v303
      %306 = vst [vmem:[%s208 + $0x8] sm:$0xff] %v304
      %s307 = smul.u32 2, %s19
      %p308 = scmp.lt.s32.totalorder %s18, 3
      %s309 = scalar_select %p308, %s18, 3
      %p310 = scmp.lt.s32.totalorder %s307, 1
      %s311 = scalar_select %p310, %s307, 1
      %s312 = smul.addr %s309, 2
      %s313 = sadd.s32 %s311, %s312
      %s314 = smul.addr %s313, 8
      %s315 = scalar_lea.vmem %s3, %s314
      // Predicated region
      $region33: #{_lambda_.1} parent=31 // pred_check
        %p316 = pneg %p116
      $region34: #{_lambda_.1} parent=31 // pred_check_branch
        %318 = sbr.rel (%p316) target = $region36
      $region35: #{_lambda_.1} parent=31 // pred_region
        %s319 = smul.u32 2, %s19
      $region36: #{_lambda_.1} parent=31 // pred_fallthru
        _
    $region32: #{_lambda_.1} parent=5 // pred_fallthru
      _
    %p320 = scmp.le.s32.totalorder 2, %s9
    // Predicated region
    $region37: #{_lambda_.1} parent=5 // pred_check
      %p321 = pneg %p320
    $region38: #{_lambda_.1} parent=5 // pred_check_branch
      %323 = sbr.rel (%p321) target = $region40
    $region39: #{_lambda_.1} parent=5 // pred_region
      %s324 = ssub.s32 %s9, 2
      // Predicated region
      $region41: #{_lambda_.1} parent=39 // pred_check
        %p325 = pneg %p122
      $region42: #{_lambda_.1} parent=39 // pred_check_branch
        %327 = sbr.rel (%p325) target = $region44
      $region43: #{_lambda_.1} parent=39 // pred_region
        %s328 = smul.u32 2, %s21
        %p329 = scmp.lt.s32.totalorder %s20, 3
        %s330 = scalar_select %p329, %s20, 3
        %p331 = scmp.lt.s32.totalorder %s328, 1
        %s332 = scalar_select %p331, %s328, 1
        %s333 = smul.addr %s330, 2
        %s334 = sadd.s32 %s332, %s333
        %s335 = smul.addr %s334, 8
        %s336 = scalar_lea.vmem %s3, %s335
      $region44: #{_lambda_.1} parent=39 // pred_fallthru
        _
    $region40: #{_lambda_.1} parent=5 // pred_fallthru
      _
  $region6: #{_lambda_.1} parent=0 // loop_footer
    %s13 = sadd.s32 1, %s9
  $region7: #{_lambda_.1} parent=0 // loop_footer_branch
    %8 = sbr.rel target = $region3
  $region8: #{_lambda_.1} parent=0 // loop_exit
    _

</llo_original>
